<compile_context>
chip_gen: v6e
topology: v6e:2x2x1
jax: 0.10.0
libtpu: 0.0.40
codegen_flags: <defaults>
</compile_context>

<pallas_src>
import jax
import jax.numpy as jnp
from jax.experimental import pallas as pl
from jax.experimental.pallas import tpu as pltpu


def _round_up(x, m):
    return (x + m - 1) // m * m


def _actor_kernel(state_ref, goal_ref,
                  w1s_ref, w1g_ref, b1_ref,
                  w2_ref, b2_ref,
                  wh_ref, bh_ref,
                  mean_ref, std_ref):
    """One batch tile of the Actor MLP (all MXU work in bf16, f32 accum)."""
    # ---- fc1 + relu (concat folded in: two dots onto one f32 accumulator)
    h1 = jnp.dot(state_ref[...], w1s_ref[...], preferred_element_type=jnp.float32)
    h1 = h1 + jnp.dot(goal_ref[...], w1g_ref[...], preferred_element_type=jnp.float32)
    h1 = jnp.maximum(h1 + b1_ref[...], 0.0).astype(w2_ref.dtype)

    # ---- fc2 + relu
    h2 = jnp.dot(h1, w2_ref[...], preferred_element_type=jnp.float32) + b2_ref[...]
    h2 = jnp.maximum(h2, 0.0).astype(wh_ref.dtype)

    # ---- fused heads: [mean | log_std] = h2 @ [W3 | Wls] + [b3 | bls]
    head = jnp.dot(h2, wh_ref[...], preferred_element_type=jnp.float32) + bh_ref[...]
    a = mean_ref.shape[-1]
    mean_ref[...] = head[:, :a]
    log_std = jnp.clip(head[:, a:], -20.0, 2.0)
    std_ref[...] = jnp.exp(log_std)


def actor_forward(state, goal, params, *, block_b=None):
    """state: (B, S) f32, goal: (B, G) f32 -> (mean, std), each (B, A) f32."""
    state = jnp.asarray(state, jnp.float32)
    goal = jnp.asarray(goal, jnp.float32)
    if state.ndim == 1:
        state = state[None, :]
    if goal.ndim == 1:
        goal = goal[None, :]

    B, S = state.shape
    G = goal.shape[1]
    H = params["w2"].shape[0]
    A = params["w3"].shape[1]

    # Pack parameters for the kernel: split W1 by input (folds the concat),
    # fuse the two heads column-wise, cast matmul weights to bf16 (f32 biases).
    w1s = params["w1"][:S].astype(jnp.bfloat16)          # (S, H)
    w1g = params["w1"][S:].astype(jnp.bfloat16)          # (G, H)
    w2 = params["w2"].astype(jnp.bfloat16)               # (H, H)
    wh = jnp.concatenate([params["w3"], params["wls"]], axis=1).astype(jnp.bfloat16)  # (H, 2A)
    b1 = params["b1"].astype(jnp.float32)                # (1, H)
    b2 = params["b2"].astype(jnp.float32)                # (1, H)
    bh = jnp.concatenate([params["b3"], params["bls"]], axis=1).astype(jnp.float32)   # (1, 2A)

    # Batch tile: multiple of 16 (bf16 sublane pack); capped for VMEM headroom.
    if block_b is None:
        block_b = min(512, max(16, _round_up(B, 16)))
    TB = _round_up(block_b, 16)
    Bp = _round_up(B, TB)
    pad = Bp - B
    st = jnp.pad(state, ((0, pad), (0, 0))).astype(jnp.bfloat16)
    gl = jnp.pad(goal, ((0, pad), (0, 0))).astype(jnp.bfloat16)

    grid = (Bp // TB,)

    in_specs = [
        pl.BlockSpec((TB, S), lambda i: (i, 0)),   # state tile
        pl.BlockSpec((TB, G), lambda i: (i, 0)),   # goal tile
        pl.BlockSpec((S, H), lambda i: (0, 0)),    # W1[:S]   (VMEM-resident)
        pl.BlockSpec((G, H), lambda i: (0, 0)),    # W1[S:]
        pl.BlockSpec((1, H), lambda i: (0, 0)),    # b1
        pl.BlockSpec((H, H), lambda i: (0, 0)),    # W2
        pl.BlockSpec((1, H), lambda i: (0, 0)),    # b2
        pl.BlockSpec((H, 2 * A), lambda i: (0, 0)),  # [W3 | Wls]
        pl.BlockSpec((1, 2 * A), lambda i: (0, 0)),  # [b3 | bls]
    ]
    out_specs = [
        pl.BlockSpec((TB, A), lambda i: (i, 0)),   # mean tile
        pl.BlockSpec((TB, A), lambda i: (i, 0)),   # std tile
    ]

    mean_p, std_p = pl.pallas_call(
        _actor_kernel,
        out_shape=(jax.ShapeDtypeStruct((Bp, A), jnp.float32),
                   jax.ShapeDtypeStruct((Bp, A), jnp.float32)),
        grid_spec=pl.GridSpec(grid=grid, in_specs=in_specs, out_specs=out_specs),
        compiler_params=pltpu.CompilerParams(
            dimension_semantics=("parallel",)),  # v7x dual-TC sharding
    )(st, gl, w1s, w1g, b1, w2, b2, wh, bh)

    return mean_p[:B], std_p[:B]


def init_actor_params(key, state_dim, goal_dim, action_dim, hidden=256):
    """Deterministic synthetic init (PyTorch-like uniform fan-in bounds).
    Weights stored as (in_features, out_features), i.e. transposed vs nn.Linear."""
    dims = [(state_dim + goal_dim, hidden),   # fc1
            (hidden, hidden),                 # fc2
            (hidden, action_dim),             # fc3
            (hidden, action_dim)]             # log_std head
    names = ["1", "2", "3", "ls"]
    params = {}
    for (fan_in, fan_out), name in zip(dims, names):
        key, kw, kb = jax.random.split(key, 3)
        bound = 1.0 / jnp.sqrt(fan_in)
        params["w" + name] = jax.random.uniform(
            kw, (fan_in, fan_out), jnp.float32, -bound, bound)
        params["b" + name] = jax.random.uniform(
            kb, (1, fan_out), jnp.float32, -bound, bound)
    return params


def _reference(state, goal, params):
    """Plain-JAX reference with matching bf16 matmul inputs / f32 accumulation."""
    bf = lambda a: a.astype(jnp.bfloat16)
    x = jnp.concatenate([state, goal], axis=1)
    h1 = jnp.maximum(jnp.dot(bf(x), bf(params["w1"]),
                             preferred_element_type=jnp.float32) + params["b1"], 0.0)
    h2 = jnp.maximum(jnp.dot(bf(h1), bf(params["w2"]),
                             preferred_element_type=jnp.float32) + params["b2"], 0.0)
    mean = jnp.dot(bf(h2), bf(params["w3"]),
                   preferred_element_type=jnp.float32) + params["b3"]
    log_std = jnp.clip(jnp.dot(bf(h2), bf(params["wls"]),
                               preferred_element_type=jnp.float32) + params["bls"],
                       -20.0, 2.0)
    return mean, jnp.exp(log_std)


if __name__ == "__main__":
    # Shapes consistent with the module: state_dim = nq+nv, goal_dim = 3,
    # action_dim = model.nu.
    batch, state_dim, goal_dim, action_dim = 2, 16, 3, 8

    key = jax.random.PRNGKey(0)
    kp, ks, kg = jax.random.split(key, 3)
    params = init_actor_params(kp, state_dim, goal_dim, action_dim)

    state = jax.random.normal(ks, (batch, state_dim), jnp.float32)
    goal = jax.random.normal(kg, (batch, goal_dim), jnp.float32)

    mean, std = actor_forward(state, goal, params)
    jax.block_until_ready((mean, std))

    mean_ref, std_ref = _reference(state, goal, params)
    assert mean.shape == (batch, action_dim) and std.shape == (batch, action_dim)
    assert jnp.allclose(mean, mean_ref, atol=2e-3, rtol=2e-3), "mean mismatch"
    assert jnp.allclose(std, std_ref, atol=2e-3, rtol=2e-3), "std mismatch"

    # Multi-tile batch (exercises the batch grid + padding path).
    kb1, kb2 = jax.random.split(kg)
    big_b = 1024 + 17
    big_state = jax.random.normal(kb1, (big_b, state_dim), jnp.float32)
    big_goal = jax.random.normal(kb2, (big_b, goal_dim), jnp.float32)
    bm, bs = actor_forward(big_state, big_goal, params, block_b=256)
    jax.block_until_ready((bm, bs))
    bm_ref, bs_ref = _reference(big_state, big_goal, params)
    assert bm.shape == (big_b, action_dim) and bs.shape == (big_b, action_dim)
    assert jnp.allclose(bm, bm_ref, atol=2e-3, rtol=2e-3), "big mean mismatch"
    assert jnp.allclose(bs, bs_ref, atol=2e-3, rtol=2e-3), "big std mismatch"

    # TODO(synk): Actor.sample (Normal.rsample + tanh + log_prob) is not part of
    # forward(); implement separately if needed.
    print("KERNEL_OK")
</pallas_src>

<mosaic_0001>
module attributes {stable_mosaic.version = 11 : i64} {
  func.func @_actor_kernel(%arg0: i32, %arg1: memref<16x16xbf16, #tpu.memory_space<vmem>>, %arg2: memref<16x3xbf16, #tpu.memory_space<vmem>>, %arg3: memref<16x256xbf16, #tpu.memory_space<vmem>>, %arg4: memref<3x256xbf16, #tpu.memory_space<vmem>>, %arg5: memref<1x256xf32, #tpu.memory_space<vmem>>, %arg6: memref<256x256xbf16, #tpu.memory_space<vmem>>, %arg7: memref<1x256xf32, #tpu.memory_space<vmem>>, %arg8: memref<256x16xbf16, #tpu.memory_space<vmem>>, %arg9: memref<1x16xf32, #tpu.memory_space<vmem>>, %arg10: memref<16x8xf32, #tpu.memory_space<vmem>>, %arg11: memref<16x8xf32, #tpu.memory_space<vmem>>) attributes {dimension_semantics = [#tpu.dimension_semantics<parallel>], iteration_bounds = array<i64: 1>, scalar_prefetch = 0 : i64, scratch_operands = 0 : i64, tpu.core_type = #tpu.core_type<tc>, window_params = [{transform_indices = @transform_0, window_bounds = array<i64: 16, 16>}, {transform_indices = @transform_1, window_bounds = array<i64: 16, 3>}, {pipeline_mode = #tpu.pipeline_mode<synchronous>, transform_indices = @transform_2, window_bounds = array<i64: 16, 256>}, {pipeline_mode = #tpu.pipeline_mode<synchronous>, transform_indices = @transform_3, window_bounds = array<i64: 3, 256>}, {pipeline_mode = #tpu.pipeline_mode<synchronous>, transform_indices = @transform_4, window_bounds = array<i64: 1, 256>}, {pipeline_mode = #tpu.pipeline_mode<synchronous>, transform_indices = @transform_5, window_bounds = array<i64: 256, 256>}, {pipeline_mode = #tpu.pipeline_mode<synchronous>, transform_indices = @transform_6, window_bounds = array<i64: 1, 256>}, {pipeline_mode = #tpu.pipeline_mode<synchronous>, transform_indices = @transform_7, window_bounds = array<i64: 256, 16>}, {pipeline_mode = #tpu.pipeline_mode<synchronous>, transform_indices = @transform_8, window_bounds = array<i64: 1, 16>}, {transform_indices = @transform_9, window_bounds = array<i64: 16, 8>}, {transform_indices = @transform_10, window_bounds = array<i64: 16, 8>}]} {
    %c0 = arith.constant 0 : index
    %c0_0 = arith.constant 0 : index
    %0 = vector.load %arg1[%c0, %c0_0] : memref<16x16xbf16, #tpu.memory_space<vmem>>, vector<16x16xbf16>
    %c0_1 = arith.constant 0 : index
    %c0_2 = arith.constant 0 : index
    %1 = vector.load %arg3[%c0_1, %c0_2] : memref<16x256xbf16, #tpu.memory_space<vmem>>, vector<16x256xbf16>
    %cst = arith.constant dense<0.000000e+00> : vector<16x256xf32>
    %2 = tpu.matmul %0, %1, %cst {dimension_numbers = #tpu.dot_dimension_numbers<[1], [0], [0], [1], [0, 0, 1, 1], [], []>} : vector<16x16xbf16>, vector<16x256xbf16>, vector<16x256xf32> -> vector<16x256xf32>
    %c0_3 = arith.constant 0 : index
    %c0_4 = arith.constant 0 : index
    %3 = vector.load %arg2[%c0_3, %c0_4] : memref<16x3xbf16, #tpu.memory_space<vmem>>, vector<16x3xbf16>
    %c0_5 = arith.constant 0 : index
    %c0_6 = arith.constant 0 : index
    %4 = vector.load %arg4[%c0_5, %c0_6] : memref<3x256xbf16, #tpu.memory_space<vmem>>, vector<3x256xbf16>
    %cst_7 = arith.constant dense<0.000000e+00> : vector<16x256xf32>
    %5 = tpu.matmul %3, %4, %cst_7 {dimension_numbers = #tpu.dot_dimension_numbers<[1], [0], [0], [1], [0, 0, 1, 1], [], []>} : vector<16x3xbf16>, vector<3x256xbf16>, vector<16x256xf32> -> vector<16x256xf32>
    %6 = arith.addf %2, %5 : vector<16x256xf32>
    %c0_8 = arith.constant 0 : index
    %c0_9 = arith.constant 0 : index
    %7 = vector.load %arg5[%c0_8, %c0_9] : memref<1x256xf32, #tpu.memory_space<vmem>>, vector<1x256xf32>
    %8 = vector.broadcast %7 : vector<1x256xf32> to vector<16x256xf32>
    %9 = arith.addf %6, %8 : vector<16x256xf32>
    %cst_10 = arith.constant 0.000000e+00 : f32
    %10 = vector.broadcast %cst_10 : f32 to vector<16x256xf32>
    %11 = arith.maximumf %9, %10 : vector<16x256xf32>
    %12 = arith.truncf %11 : vector<16x256xf32> to vector<16x256xbf16>
    %c0_11 = arith.constant 0 : index
    %c0_12 = arith.constant 0 : index
    %13 = vector.load %arg6[%c0_11, %c0_12] : memref<256x256xbf16, #tpu.memory_space<vmem>>, vector<256x256xbf16>
    %cst_13 = arith.constant dense<0.000000e+00> : vector<16x256xf32>
    %14 = tpu.matmul %12, %13, %cst_13 {dimension_numbers = #tpu.dot_dimension_numbers<[1], [0], [0], [1], [0, 0, 1, 1], [], []>} : vector<16x256xbf16>, vector<256x256xbf16>, vector<16x256xf32> -> vector<16x256xf32>
    %c0_14 = arith.constant 0 : index
    %c0_15 = arith.constant 0 : index
    %15 = vector.load %arg7[%c0_14, %c0_15] : memref<1x256xf32, #tpu.memory_space<vmem>>, vector<1x256xf32>
    %16 = vector.broadcast %15 : vector<1x256xf32> to vector<16x256xf32>
    %17 = arith.addf %14, %16 : vector<16x256xf32>
    %cst_16 = arith.constant 0.000000e+00 : f32
    %18 = vector.broadcast %cst_16 : f32 to vector<16x256xf32>
    %19 = arith.maximumf %17, %18 : vector<16x256xf32>
    %20 = arith.truncf %19 : vector<16x256xf32> to vector<16x256xbf16>
    %c0_17 = arith.constant 0 : index
    %c0_18 = arith.constant 0 : index
    %21 = vector.load %arg8[%c0_17, %c0_18] : memref<256x16xbf16, #tpu.memory_space<vmem>>, vector<256x16xbf16>
    %cst_19 = arith.constant dense<0.000000e+00> : vector<16x16xf32>
    %22 = tpu.matmul %20, %21, %cst_19 {dimension_numbers = #tpu.dot_dimension_numbers<[1], [0], [0], [1], [0, 0, 1, 1], [], []>} : vector<16x256xbf16>, vector<256x16xbf16>, vector<16x16xf32> -> vector<16x16xf32>
    %c0_20 = arith.constant 0 : index
    %c0_21 = arith.constant 0 : index
    %23 = vector.load %arg9[%c0_20, %c0_21] : memref<1x16xf32, #tpu.memory_space<vmem>>, vector<1x16xf32>
    %24 = vector.broadcast %23 : vector<1x16xf32> to vector<16x16xf32>
    %25 = arith.addf %22, %24 : vector<16x16xf32>
    %26 = vector.extract_strided_slice %25 {offsets = [0, 0], sizes = [16, 8], strides = [1, 1]} : vector<16x16xf32> to vector<16x8xf32>
    %c0_22 = arith.constant 0 : index
    %c0_23 = arith.constant 0 : index
    %27 = vector.load %arg10[%c0_22, %c0_23] : memref<16x8xf32, #tpu.memory_space<vmem>>, vector<16x8xf32>
    tpu.vector_store %arg10[%c0_22, %c0_23], %26 {strides = array<i32>} : memref<16x8xf32, #tpu.memory_space<vmem>>, vector<16x8xf32>,
    %28 = vector.extract_strided_slice %25 {offsets = [0, 8], sizes = [16, 8], strides = [1, 1]} : vector<16x16xf32> to vector<16x8xf32>
    %cst_24 = arith.constant -2.000000e+01 : f32
    %cst_25 = arith.constant 2.000000e+00 : f32
    %29 = vector.broadcast %cst_24 : f32 to vector<16x8xf32>
    %30 = arith.maximumf %29, %28 : vector<16x8xf32>
    %31 = vector.broadcast %cst_25 : f32 to vector<16x8xf32>
    %32 = arith.minimumf %31, %30 : vector<16x8xf32>
    %33 = math.exp %32 : vector<16x8xf32>
    %c0_26 = arith.constant 0 : index
    %c0_27 = arith.constant 0 : index
    %34 = vector.load %arg11[%c0_26, %c0_27] : memref<16x8xf32, #tpu.memory_space<vmem>>, vector<16x8xf32>
    tpu.vector_store %arg11[%c0_26, %c0_27], %33 {strides = array<i32>} : memref<16x8xf32, #tpu.memory_space<vmem>>, vector<16x8xf32>,
    return
  }
  func.func @transform_0(%arg0: i32) -> (i32, i32) {
    %c0_i32 = arith.constant 0 : i32
    %c0_i32_0 = arith.constant 0 : i32
    return %arg0, %c0_i32 : i32, i32
  }
  func.func @transform_1(%arg0: i32) -> (i32, i32) {
    %c0_i32 = arith.constant 0 : i32
    %c0_i32_0 = arith.constant 0 : i32
    return %arg0, %c0_i32 : i32, i32
  }
  func.func @transform_2(%arg0: i32) -> (i32, i32) {
    %c0_i32 = arith.constant 0 : i32
    %c0_i32_0 = arith.constant 0 : i32
    %c0_i32_1 = arith.constant 0 : i32
    return %c0_i32, %c0_i32_0 : i32, i32
  }
  func.func @transform_3(%arg0: i32) -> (i32, i32) {
    %c0_i32 = arith.constant 0 : i32
    %c0_i32_0 = arith.constant 0 : i32
    %c0_i32_1 = arith.constant 0 : i32
    return %c0_i32, %c0_i32_0 : i32, i32
  }
  func.func @transform_4(%arg0: i32) -> (i32, i32) {
    %c0_i32 = arith.constant 0 : i32
    %c0_i32_0 = arith.constant 0 : i32
    %c0_i32_1 = arith.constant 0 : i32
    return %c0_i32, %c0_i32_0 : i32, i32
  }
  func.func @transform_5(%arg0: i32) -> (i32, i32) {
    %c0_i32 = arith.constant 0 : i32
    %c0_i32_0 = arith.constant 0 : i32
    %c0_i32_1 = arith.constant 0 : i32
    return %c0_i32, %c0_i32_0 : i32, i32
  }
  func.func @transform_6(%arg0: i32) -> (i32, i32) {
    %c0_i32 = arith.constant 0 : i32
    %c0_i32_0 = arith.constant 0 : i32
    %c0_i32_1 = arith.constant 0 : i32
    return %c0_i32, %c0_i32_0 : i32, i32
  }
  func.func @transform_7(%arg0: i32) -> (i32, i32) {
    %c0_i32 = arith.constant 0 : i32
    %c0_i32_0 = arith.constant 0 : i32
    %c0_i32_1 = arith.constant 0 : i32
    return %c0_i32, %c0_i32_0 : i32, i32
  }
  func.func @transform_8(%arg0: i32) -> (i32, i32) {
    %c0_i32 = arith.constant 0 : i32
    %c0_i32_0 = arith.constant 0 : i32
    %c0_i32_1 = arith.constant 0 : i32
    return %c0_i32, %c0_i32_0 : i32, i32
  }
  func.func @transform_9(%arg0: i32) -> (i32, i32) {
    %c0_i32 = arith.constant 0 : i32
    %c0_i32_0 = arith.constant 0 : i32
    return %arg0, %c0_i32 : i32, i32
  }
  func.func @transform_10(%arg0: i32) -> (i32, i32) {
    %c0_i32 = arith.constant 0 : i32
    %c0_i32_0 = arith.constant 0 : i32
    return %arg0, %c0_i32 : i32, i32
  }
}

</mosaic_0001>

<llo_original>
// kernel: tpu_custom_call.1
$region0: #{tpu_custom_call.1}
  #allocation0 [shape = 'u32[]', space=smem, size = 0x4, offset = 0x4, fixed_abs, tag = 'smem constant byte address 0x4 - core index']
  #allocation1 [shape = 'u32[144,128]{1,0:T(1,128)}', space=vmem, size = 0x12000, scoped, tag = 'internal scratch']
  %s0 = inlined_call_operand.vmem [shape: bf16[16,16], index: 0, kind: input, shape index: {}]
  %s1 = inlined_call_operand.vmem [shape: bf16[16,3], index: 1, kind: input, shape index: {}]
  %s2 = inlined_call_operand.vmem [shape: bf16[16,256], index: 2, kind: input, shape index: {}]
  %s3 = inlined_call_operand.vmem [shape: bf16[3,256], index: 3, kind: input, shape index: {}]
  %s4 = inlined_call_operand.vmem [shape: f32[1,256], index: 4, kind: input, shape index: {}]
  %s5 = inlined_call_operand.hbm [shape: bf16[256,256], index: 5, kind: input, shape index: {}]
  %s6 = inlined_call_operand.vmem [shape: f32[1,256], index: 6, kind: input, shape index: {}]
  %s7 = inlined_call_operand.vmem [shape: bf16[256,16], index: 7, kind: input, shape index: {}]
  %s8 = inlined_call_operand.vmem [shape: f32[1,16], index: 8, kind: input, shape index: {}]
  %s9 = inlined_call_operand.vmem [shape: f32[16,8], index: 9, kind: output, shape index: {0}]
  %s10 = inlined_call_operand.vmem [shape: f32[16,8], index: 10, kind: output, shape index: {1}]
  %11 = xla_tuple %s9, %s10
  %s12 = sld [smem:[#allocation0]]
  $region58: #{tpu_custom_call.1} parent=0
    _
  %s14 = ssub.s32 1, %s12
  %s15 = scalar_select 0, %s14, %s12
  $region1: #{tpu_custom_call.1} parent=0
    #allocation2 [shape = 'u8[131072]{0}', space=vmem, size = 0x20000, scoped, tag = 'input window, operand 5, single buffered']
    #allocation3 [shape = 's32[1]{0}', space=sflag, size = 0x4, scoped, tag = 'scoped memory for tpu_custom_call.1']
    %16 = vsyncpa [#allocation3], 0
    // Predicated region
    $region2: #{tpu_custom_call.1} parent=1 // pred_check
      _
    $region3: #{tpu_custom_call.1} parent=1 // pred_check_branch
      %18 = sbr.rel (0) target = $region5
    $region4: #{tpu_custom_call.1} parent=1 // pred_region
      _
    $region5: #{tpu_custom_call.1} parent=1 // pred_fallthru
      _
    // Predicated region
    $region6: #{tpu_custom_call.1} parent=1 // pred_check
      _
    $region7: #{tpu_custom_call.1} parent=1 // pred_check_branch
      %20 = sbr.rel (0) target = $region9
    $region8: #{tpu_custom_call.1} parent=1 // pred_region
      _
    $region9: #{tpu_custom_call.1} parent=1 // pred_fallthru
      _
    // Predicated region
    $region10: #{tpu_custom_call.1} parent=1 // pred_check
      _
    $region11: #{tpu_custom_call.1} parent=1 // pred_check_branch
      %22 = sbr.rel (0) target = $region13
    $region12: #{tpu_custom_call.1} parent=1 // pred_region
      _
    $region13: #{tpu_custom_call.1} parent=1 // pred_fallthru
      _
    // Predicated region
    $region14: #{tpu_custom_call.1} parent=1 // pred_check
      _
    $region15: #{tpu_custom_call.1} parent=1 // pred_check_branch
      %24 = sbr.rel (0) target = $region17
    $region16: #{tpu_custom_call.1} parent=1 // pred_region
      _
    $region17: #{tpu_custom_call.1} parent=1 // pred_fallthru
      _
    // Predicated region
    $region18: #{tpu_custom_call.1} parent=1 // pred_check
      _
    $region19: #{tpu_custom_call.1} parent=1 // pred_check_branch
      %26 = sbr.rel (0) target = $region21
    $region20: #{tpu_custom_call.1} parent=1 // pred_region
      _
    $region21: #{tpu_custom_call.1} parent=1 // pred_fallthru
      _
    // Predicated region
    $region22: #{tpu_custom_call.1} parent=1 // pred_check
      _
    $region23: #{tpu_custom_call.1} parent=1 // pred_check_branch
      %28 = sbr.rel (0) target = $region25
    $region24: #{tpu_custom_call.1} parent=1 // pred_region
      %s30 = ssub.s32 4096, 4096
      %31 = vsyncadd [#allocation3], %s30
      %s32 = sshll.u32 [#allocation2], 4
      %s33 = int_to_ptr.vmem [resolvable:$true] %s32
      %38 = dma.hbm_to_vmem [thread:$0]  %s5, 4096, %s33, [#allocation3], 128, 128, 8
    $region25: #{tpu_custom_call.1} parent=1 // pred_fallthru
      _
    // Predicated region
    $region26: #{tpu_custom_call.1} parent=1 // pred_check
      _
    $region27: #{tpu_custom_call.1} parent=1 // pred_check_branch
      %40 = sbr.rel (0) target = $region29
    $region28: #{tpu_custom_call.1} parent=1 // pred_region
      _
    $region29: #{tpu_custom_call.1} parent=1 // pred_fallthru
      _
    // Predicated region
    $region30: #{tpu_custom_call.1} parent=1 // pred_check
      _
    $region31: #{tpu_custom_call.1} parent=1 // pred_check_branch
      %42 = sbr.rel (0) target = $region33
    $region32: #{tpu_custom_call.1} parent=1 // pred_region
      _
    $region33: #{tpu_custom_call.1} parent=1 // pred_fallthru
      _
    // Predicated region
    $region34: #{tpu_custom_call.1} parent=1 // pred_check
      _
    $region35: #{tpu_custom_call.1} parent=1 // pred_check_branch
      %44 = sbr.rel (0) target = $region37
    $region36: #{tpu_custom_call.1} parent=1 // pred_region
      _
    $region37: #{tpu_custom_call.1} parent=1 // pred_fallthru
      _
    // Predicated region
    $region38: #{tpu_custom_call.1} parent=1 // pred_check
      _
    $region39: #{tpu_custom_call.1} parent=1 // pred_check_branch
      %46 = sbr.rel (0) target = $region41
    $region40: #{tpu_custom_call.1} parent=1 // pred_region
      %47 = dma.done [#allocation3], 4096
    $region41: #{tpu_custom_call.1} parent=1 // pred_fallthru
      _
    %v49 = vld [vmem:[%s0] sm:$0xf]
    %v50 = vld [vmem:[%s0 + $0x4] sm:$0xf]
    %v51 = vld [vmem:[%s2] sm:$0xff]
    %v52 = vld [vmem:[%s2 + $0x8] sm:$0xff]
    %v53 = vld [vmem:[%s1] sm:$0xf]
    %v54 = vld [vmem:[%s1 + $0x4] sm:$0xf]
    %v55 = vld [vmem:[%s3] sm:$0xf]
    %v58 = vunpack.c.l.b16 %v53
    %v59 = vunpack.c.l.b16 %v54
    %v60 = vpack.c.b16 %v59, %v58
    %v63 = vunpack.c.l.s4 1983009808
    %v64 = vunpack.c.0.s8 %v63
    %v65 = vlaneseq
    %v66 = vshrl.u32 %v65, 7
    %v67 = vsub.s32 %v64, %v66
    %v68 = vrot.slane %v55, %v67
    %v69 = vcombine.high %v68, %v68
    %vm70 = vcmask 23552
    %v72 = vsel %vm70, %v60, 0
    %vm74 = vcmask 1040384
    %vm75 = vcmask 1041408
    %v76 = vsel %vm74, 4294967295, 65535
    %v77 = vsel %vm75, %v76, 0
    %v79 = vand.u32 %v68, %v77
    %v82 = vand.u32 %v69, %v77
    %84 = vmatprep.subr.bf16.mxu0 0
    %85 = vmatpush1.bf16.msra.mxu0 0
    %86 = vmatprep.subr.bf16.mxu0 0
    %87 = vmatpush1.bf16.msra.mxu0 0
    %88 = vmatprep.subr.bf16.mxu0 0
    %89 = vmatpush1.bf16.msra.mxu0 0
    %90 = vmatprep.subr.bf16.mxu0 0
    %91 = vmatpush1.bf16.msra.mxu0 0
    %92 = vmatprep.subr.bf16.mxu0 0
    %93 = vmatpush1.bf16.msra.mxu0 0
    %94 = vmatprep.subr.bf16.mxu0 0
    %95 = vmatpush1.bf16.msra.mxu0 0
    %96 = vmatprep.subr.bf16.mxu0 0
    %97 = vmatpush1.bf16.msra.mxu0 0
    %98 = vmatprep.subr.bf16.mxu0 %v82
    %99 = vmatpush1.bf16.msra.mxu0 %v79
    %100 = vmatprep.subr.bf16.mxu0 0
    %101 = vmatpush2.bf16.msra.mxu0 0
    %102 = vmatprep.subr.bf16.mxu0 0
    %103 = vmatpush2.bf16.msra.mxu0 0
    %104 = vmatprep.subr.bf16.mxu0 0
    %105 = vmatpush2.bf16.msra.mxu0 0
    %106 = vmatprep.subr.bf16.mxu0 0
    %107 = vmatpush2.bf16.msra.mxu0 0
    %108 = vmatprep.subr.bf16.mxu0 0
    %109 = vmatpush2.bf16.msra.mxu0 0
    %110 = vmatprep.subr.bf16.mxu0 0
    %111 = vmatpush2.bf16.msra.mxu0 0
    %112 = vmatprep.subr.bf16.mxu0 0
    %113 = vmatpush2.bf16.msra.mxu0 0
    %114 = vmatprep.subr.bf16.mxu0 0
    %115 = vmatpush2.bf16.msra.mxu0 0
    %116 = vmatprep.mubr.bf16.mxu0 0
    %117 = vmatmul.mubr.bf16.gmra.mxu0 %v72
    %v118 = vpop.f32.mrf.mxu0
    %v119 = vadd.f32 0.0, %v118
    %v120 = vpop.f32.mrf.mxu0
    %v121 = vadd.f32 0.0, %v120
    %v122 = vpop.f32.mrf.mxu0
    %v123 = vadd.f32 0.0, %v122
    %v124 = vpop.f32.mrf.mxu0
    %v125 = vadd.f32 0.0, %v124
    %126 = vdwg.mxu0
    %v129 = vunpack.c.l.b16 %v49
    %v130 = vunpack.c.l.b16 %v50
    %v131 = vpack.c.b16 %v130, %v129
    %v134 = vunpack.c.l.b16 %v51
    %v135 = vunpack.c.h.b16 %v51
    %v136 = vunpack.c.l.b16 %v52
    %v137 = vunpack.c.h.b16 %v52
    %v138 = vpack.c.b16 %v136, %v134
    %v139 = vpack.c.b16 %v137, %v135
    %vm142 = vcmask 130048
    %v144 = vsel %vm142, %v131, 0
    %146 = vmatprep.subr.bf16.mxu0 0
    %147 = vmatpush1.bf16.msra.mxu0 0
    %148 = vmatprep.subr.bf16.mxu0 0
    %149 = vmatpush1.bf16.msra.mxu0 0
    %150 = vmatprep.subr.bf16.mxu0 0
    %151 = vmatpush1.bf16.msra.mxu0 0
    %152 = vmatprep.subr.bf16.mxu0 0
    %153 = vmatpush1.bf16.msra.mxu0 0
    %154 = vmatprep.subr.bf16.mxu0 0
    %155 = vmatpush1.bf16.msra.mxu0 0
    %156 = vmatprep.subr.bf16.mxu0 0
    %157 = vmatpush1.bf16.msra.mxu0 0
    %158 = vmatprep.subr.bf16.mxu0 0
    %159 = vmatpush1.bf16.msra.mxu0 0
    %160 = vmatprep.subr.bf16.mxu0 %v139
    %161 = vmatpush1.bf16.msra.mxu0 %v138
    %162 = vmatprep.subr.bf16.mxu0 0
    %163 = vmatpush2.bf16.msra.mxu0 0
    %164 = vmatprep.subr.bf16.mxu0 0
    %165 = vmatpush2.bf16.msra.mxu0 0
    %166 = vmatprep.subr.bf16.mxu0 0
    %167 = vmatpush2.bf16.msra.mxu0 0
    %168 = vmatprep.subr.bf16.mxu0 0
    %169 = vmatpush2.bf16.msra.mxu0 0
    %170 = vmatprep.subr.bf16.mxu0 0
    %171 = vmatpush2.bf16.msra.mxu0 0
    %172 = vmatprep.subr.bf16.mxu0 0
    %173 = vmatpush2.bf16.msra.mxu0 0
    %174 = vmatprep.subr.bf16.mxu0 0
    %175 = vmatpush2.bf16.msra.mxu0 0
    %176 = vmatprep.subr.bf16.mxu0 0
    %177 = vmatpush2.bf16.msra.mxu0 0
    %178 = vmatprep.mubr.bf16.mxu0 0
    %179 = vmatmul.mubr.bf16.gmra.mxu0 %v144
    %v180 = vpop.f32.mrf.mxu0
    %v181 = vadd.f32 %v119, %v180
    %v182 = vpop.f32.mrf.mxu0
    %v183 = vadd.f32 %v121, %v182
    %v184 = vpop.f32.mrf.mxu0
    %v185 = vadd.f32 %v123, %v184
    %v186 = vpop.f32.mrf.mxu0
    %v187 = vadd.f32 %v125, %v186
    %188 = vdwg.mxu0
    %v189 = vld [vmem:[%s4] sm:$0x3]
    %v191 = vlaneseq
    %v192 = vshrl.u32 %v191, 7
    %v193 = vsub.s32 0, %v192
    %v194 = vrot.slane %v189, %v193
    %v195 = vlaneseq
    %v196 = vshrl.u32 %v195, 7
    %v197 = vsub.s32 1, %v196
    %v198 = vrot.slane %v189, %v197
    %v201 = vadd.f32 %v181, %v194
    %v202 = vadd.f32 %v183, %v198
    %v203 = vadd.f32 %v185, %v194
    %v204 = vadd.f32 %v187, %v198
    %v205 = vmax.f32 %v201, 0.0
    %v206 = vmax.f32 %v202, 0.0
    %v207 = vmax.f32 %v203, 0.0
    %v208 = vmax.f32 %v204, 0.0
    %v209 = vpack.c.bf16 %v207, %v205
    %v210 = vpack.c.bf16 %v208, %v206
    %v211 = vld [vmem:[#allocation2] sm:$0xff]
    %v212 = vld [vmem:[#allocation2 + $0x8] sm:$0xff]
    %v213 = vld [vmem:[#allocation2 + $0x10] sm:$0xff]
    %v214 = vld [vmem:[#allocation2 + $0x18] sm:$0xff]
    %v215 = vld [vmem:[#allocation2 + $0x20] sm:$0xff]
    %v216 = vld [vmem:[#allocation2 + $0x28] sm:$0xff]
    %v217 = vld [vmem:[#allocation2 + $0x30] sm:$0xff]
    %v218 = vld [vmem:[#allocation2 + $0x38] sm:$0xff]
    %v219 = vld [vmem:[#allocation2 + $0x40] sm:$0xff]
    %v220 = vld [vmem:[#allocation2 + $0x48] sm:$0xff]
    %v221 = vld [vmem:[#allocation2 + $0x50] sm:$0xff]
    %v222 = vld [vmem:[#allocation2 + $0x58] sm:$0xff]
    %v223 = vld [vmem:[#allocation2 + $0x60] sm:$0xff]
    %v224 = vld [vmem:[#allocation2 + $0x68] sm:$0xff]
    %v225 = vld [vmem:[#allocation2 + $0x70] sm:$0xff]
    %v226 = vld [vmem:[#allocation2 + $0x78] sm:$0xff]
    %v227 = vld [vmem:[#allocation2 + $0x80] sm:$0xff]
    %v228 = vld [vmem:[#allocation2 + $0x88] sm:$0xff]
    %v229 = vld [vmem:[#allocation2 + $0x90] sm:$0xff]
    %v230 = vld [vmem:[#allocation2 + $0x98] sm:$0xff]
    %v231 = vld [vmem:[#allocation2 + $0xa0] sm:$0xff]
    %v232 = vld [vmem:[#allocation2 + $0xa8] sm:$0xff]
    %v233 = vld [vmem:[#allocation2 + $0xb0] sm:$0xff]
    %v234 = vld [vmem:[#allocation2 + $0xb8] sm:$0xff]
    %v235 = vld [vmem:[#allocation2 + $0xc0] sm:$0xff]
    %v236 = vld [vmem:[#allocation2 + $0xc8] sm:$0xff]
    %v237 = vld [vmem:[#allocation2 + $0xd0] sm:$0xff]
    %v238 = vld [vmem:[#allocation2 + $0xd8] sm:$0xff]
    %v239 = vld [vmem:[#allocation2 + $0xe0] sm:$0xff]
    %v240 = vld [vmem:[#allocation2 + $0xe8] sm:$0xff]
    %v241 = vld [vmem:[#allocation2 + $0xf0] sm:$0xff]
    %v242 = vld [vmem:[#allocation2 + $0xf8] sm:$0xff]
    %v243 = vld [vmem:[%s6] sm:$0x3]
    %v245 = vlaneseq
    %v246 = vshrl.u32 %v245, 7
    %v247 = vsub.s32 0, %v246
    %v248 = vrot.slane %v243, %v247
    %v249 = vlaneseq
    %v250 = vshrl.u32 %v249, 7
    %v251 = vsub.s32 1, %v250
    %v252 = vrot.slane %v243, %v251
    %v287 = vunpack.c.l.b16 %v211
    %v288 = vunpack.c.h.b16 %v211
    %v289 = vunpack.c.l.b16 %v212
    %v290 = vunpack.c.h.b16 %v212
    %v291 = vunpack.c.l.b16 %v213
    %v292 = vunpack.c.h.b16 %v213
    %v293 = vunpack.c.l.b16 %v214
    %v294 = vunpack.c.h.b16 %v214
    %v295 = vunpack.c.l.b16 %v215
    %v296 = vunpack.c.h.b16 %v215
    %v297 = vunpack.c.l.b16 %v216
    %v298 = vunpack.c.h.b16 %v216
    %v299 = vunpack.c.l.b16 %v217
    %v300 = vunpack.c.h.b16 %v217
    %v301 = vunpack.c.l.b16 %v218
    %v302 = vunpack.c.h.b16 %v218
    %v303 = vunpack.c.l.b16 %v219
    %v304 = vunpack.c.h.b16 %v219
    %v305 = vunpack.c.l.b16 %v220
    %v306 = vunpack.c.h.b16 %v220
    %v307 = vunpack.c.l.b16 %v221
    %v308 = vunpack.c.h.b16 %v221
    %v309 = vunpack.c.l.b16 %v222
    %v310 = vunpack.c.h.b16 %v222
    %v311 = vunpack.c.l.b16 %v223
    %v312 = vunpack.c.h.b16 %v223
    %v313 = vunpack.c.l.b16 %v224
    %v314 = vunpack.c.h.b16 %v224
    %v315 = vunpack.c.l.b16 %v225
    %v316 = vunpack.c.h.b16 %v225
    %v317 = vunpack.c.l.b16 %v226
    %v318 = vunpack.c.h.b16 %v226
    %v319 = vunpack.c.l.b16 %v227
    %v320 = vunpack.c.h.b16 %v227
    %v321 = vunpack.c.l.b16 %v228
    %v322 = vunpack.c.h.b16 %v228
    %v323 = vunpack.c.l.b16 %v229
    %v324 = vunpack.c.h.b16 %v229
    %v325 = vunpack.c.l.b16 %v230
    %v326 = vunpack.c.h.b16 %v230
    %v327 = vunpack.c.l.b16 %v231
    %v328 = vunpack.c.h.b16 %v231
    %v329 = vunpack.c.l.b16 %v232
    %v330 = vunpack.c.h.b16 %v232
    %v331 = vunpack.c.l.b16 %v233
    %v332 = vunpack.c.h.b16 %v233
    %v333 = vunpack.c.l.b16 %v234
    %v334 = vunpack.c.h.b16 %v234
    %v335 = vunpack.c.l.b16 %v235
    %v336 = vunpack.c.h.b16 %v235
    %v337 = vunpack.c.l.b16 %v236
    %v338 = vunpack.c.h.b16 %v236
    %v339 = vunpack.c.l.b16 %v237
    %v340 = vunpack.c.h.b16 %v237
    %v341 = vunpack.c.l.b16 %v238
    %v342 = vunpack.c.h.b16 %v238
    %v343 = vunpack.c.l.b16 %v239
    %v344 = vunpack.c.h.b16 %v239
    %v345 = vunpack.c.l.b16 %v240
    %v346 = vunpack.c.h.b16 %v240
    %v347 = vunpack.c.l.b16 %v241
    %v348 = vunpack.c.h.b16 %v241
    %v349 = vunpack.c.l.b16 %v242
    %v350 = vunpack.c.h.b16 %v242
    %v351 = vpack.c.b16 %v289, %v287
    %v352 = vpack.c.b16 %v290, %v288
    %v353 = vpack.c.b16 %v293, %v291
    %v354 = vpack.c.b16 %v294, %v292
    %v355 = vpack.c.b16 %v297, %v295
    %v356 = vpack.c.b16 %v298, %v296
    %v357 = vpack.c.b16 %v301, %v299
    %v358 = vpack.c.b16 %v302, %v300
    %v359 = vpack.c.b16 %v305, %v303
    %v360 = vpack.c.b16 %v306, %v304
    %v361 = vpack.c.b16 %v309, %v307
    %v362 = vpack.c.b16 %v310, %v308
    %v363 = vpack.c.b16 %v313, %v311
    %v364 = vpack.c.b16 %v314, %v312
    %v365 = vpack.c.b16 %v317, %v315
    %v366 = vpack.c.b16 %v318, %v316
    %v367 = vpack.c.b16 %v321, %v319
    %v368 = vpack.c.b16 %v322, %v320
    %v369 = vpack.c.b16 %v325, %v323
    %v370 = vpack.c.b16 %v326, %v324
    %v371 = vpack.c.b16 %v329, %v327
    %v372 = vpack.c.b16 %v330, %v328
    %v373 = vpack.c.b16 %v333, %v331
    %v374 = vpack.c.b16 %v334, %v332
    %v375 = vpack.c.b16 %v337, %v335
    %v376 = vpack.c.b16 %v338, %v336
    %v377 = vpack.c.b16 %v341, %v339
    %v378 = vpack.c.b16 %v342, %v340
    %v379 = vpack.c.b16 %v345, %v343
    %v380 = vpack.c.b16 %v346, %v344
    %v381 = vpack.c.b16 %v349, %v347
    %v382 = vpack.c.b16 %v350, %v348
    %415 = vmatprep.subr.bf16.mxu0 %v366
    %416 = vmatpush1.bf16.msra.mxu0 %v365
    %417 = vmatprep.subr.bf16.mxu0 %v364
    %418 = vmatpush1.bf16.msra.mxu0 %v363
    %419 = vmatprep.subr.bf16.mxu0 %v362
    %420 = vmatpush1.bf16.msra.mxu0 %v361
    %421 = vmatprep.subr.bf16.mxu0 %v360
    %422 = vmatpush1.bf16.msra.mxu0 %v359
    %423 = vmatprep.subr.bf16.mxu0 %v358
    %424 = vmatpush1.bf16.msra.mxu0 %v357
    %425 = vmatprep.subr.bf16.mxu0 %v356
    %426 = vmatpush1.bf16.msra.mxu0 %v355
    %427 = vmatprep.subr.bf16.mxu0 %v354
    %428 = vmatpush1.bf16.msra.mxu0 %v353
    %429 = vmatprep.subr.bf16.mxu0 %v352
    %430 = vmatpush1.bf16.msra.mxu0 %v351
    %431 = vmatprep.subr.bf16.mxu0 %v382
    %432 = vmatpush2.bf16.msra.mxu0 %v381
    %433 = vmatprep.subr.bf16.mxu0 %v380
    %434 = vmatpush2.bf16.msra.mxu0 %v379
    %435 = vmatprep.subr.bf16.mxu0 %v378
    %436 = vmatpush2.bf16.msra.mxu0 %v377
    %437 = vmatprep.subr.bf16.mxu0 %v376
    %438 = vmatpush2.bf16.msra.mxu0 %v375
    %439 = vmatprep.subr.bf16.mxu0 %v374
    %440 = vmatpush2.bf16.msra.mxu0 %v373
    %441 = vmatprep.subr.bf16.mxu0 %v372
    %442 = vmatpush2.bf16.msra.mxu0 %v371
    %443 = vmatprep.subr.bf16.mxu0 %v370
    %444 = vmatpush2.bf16.msra.mxu0 %v369
    %445 = vmatprep.subr.bf16.mxu0 %v368
    %446 = vmatpush2.bf16.msra.mxu0 %v367
    %447 = vmatprep.mubr.bf16.mxu0 %v210
    %448 = vmatmul.mubr.bf16.gmra.mxu0 %v209
    %v449 = vpop.f32.mrf.mxu0
    %v450 = vadd.f32 %v248, %v449
    %v451 = vpop.f32.mrf.mxu0
    %v452 = vadd.f32 %v252, %v451
    %v453 = vpop.f32.mrf.mxu0
    %v454 = vadd.f32 %v248, %v453
    %v455 = vpop.f32.mrf.mxu0
    %v456 = vadd.f32 %v252, %v455
    %457 = vdwg.mxu0
    %v458 = vmax.f32 %v450, 0.0
    %v459 = vmax.f32 %v452, 0.0
    %v460 = vmax.f32 %v454, 0.0
    %v461 = vmax.f32 %v456, 0.0
    %v462 = vpack.c.bf16 %v460, %v458
    %v463 = vpack.c.bf16 %v461, %v459
    %v464 = vld [vmem:[%s7] sm:$0xf]
    %v465 = vld [vmem:[%s7 + $0x4] sm:$0xf]
    %v466 = vld [vmem:[%s7 + $0x8] sm:$0xf]
    %v467 = vld [vmem:[%s7 + $0xc] sm:$0xf]
    %v468 = vld [vmem:[%s7 + $0x10] sm:$0xf]
    %v469 = vld [vmem:[%s7 + $0x14] sm:$0xf]
    %v470 = vld [vmem:[%s7 + $0x18] sm:$0xf]
    %v471 = vld [vmem:[%s7 + $0x1c] sm:$0xf]
    %v472 = vld [vmem:[%s7 + $0x20] sm:$0xf]
    %v473 = vld [vmem:[%s7 + $0x24] sm:$0xf]
    %v474 = vld [vmem:[%s7 + $0x28] sm:$0xf]
    %v475 = vld [vmem:[%s7 + $0x2c] sm:$0xf]
    %v476 = vld [vmem:[%s7 + $0x30] sm:$0xf]
    %v477 = vld [vmem:[%s7 + $0x34] sm:$0xf]
    %v478 = vld [vmem:[%s7 + $0x38] sm:$0xf]
    %v479 = vld [vmem:[%s7 + $0x3c] sm:$0xf]
    %v480 = vld [vmem:[%s7 + $0x40] sm:$0xf]
    %v481 = vld [vmem:[%s7 + $0x44] sm:$0xf]
    %v482 = vld [vmem:[%s7 + $0x48] sm:$0xf]
    %v483 = vld [vmem:[%s7 + $0x4c] sm:$0xf]
    %v484 = vld [vmem:[%s7 + $0x50] sm:$0xf]
    %v485 = vld [vmem:[%s7 + $0x54] sm:$0xf]
    %v486 = vld [vmem:[%s7 + $0x58] sm:$0xf]
    %v487 = vld [vmem:[%s7 + $0x5c] sm:$0xf]
    %v488 = vld [vmem:[%s7 + $0x60] sm:$0xf]
    %v489 = vld [vmem:[%s7 + $0x64] sm:$0xf]
    %v490 = vld [vmem:[%s7 + $0x68] sm:$0xf]
    %v491 = vld [vmem:[%s7 + $0x6c] sm:$0xf]
    %v492 = vld [vmem:[%s7 + $0x70] sm:$0xf]
    %v493 = vld [vmem:[%s7 + $0x74] sm:$0xf]
    %v494 = vld [vmem:[%s7 + $0x78] sm:$0xf]
    %v495 = vld [vmem:[%s7 + $0x7c] sm:$0xf]
    %v496 = vld [vmem:[%s8] sm:$0x1]
    %v498 = vlaneseq
    %v499 = vshrl.u32 %v498, 7
    %v500 = vsub.s32 0, %v499
    %v501 = vrot.slane %v496, %v500
    %v535 = vunpack.c.l.b16 %v464
    %v536 = vunpack.c.l.b16 %v465
    %v537 = vunpack.c.l.b16 %v466
    %v538 = vunpack.c.l.b16 %v467
    %v539 = vunpack.c.l.b16 %v468
    %v540 = vunpack.c.l.b16 %v469
    %v541 = vunpack.c.l.b16 %v470
    %v542 = vunpack.c.l.b16 %v471
    %v543 = vunpack.c.l.b16 %v472
    %v544 = vunpack.c.l.b16 %v473
    %v545 = vunpack.c.l.b16 %v474
    %v546 = vunpack.c.l.b16 %v475
    %v547 = vunpack.c.l.b16 %v476
    %v548 = vunpack.c.l.b16 %v477
    %v549 = vunpack.c.l.b16 %v478
    %v550 = vunpack.c.l.b16 %v479
    %v551 = vunpack.c.l.b16 %v480
    %v552 = vunpack.c.l.b16 %v481
    %v553 = vunpack.c.l.b16 %v482
    %v554 = vunpack.c.l.b16 %v483
    %v555 = vunpack.c.l.b16 %v484
    %v556 = vunpack.c.l.b16 %v485
    %v557 = vunpack.c.l.b16 %v486
    %v558 = vunpack.c.l.b16 %v487
    %v559 = vunpack.c.l.b16 %v488
    %v560 = vunpack.c.l.b16 %v489
    %v561 = vunpack.c.l.b16 %v490
    %v562 = vunpack.c.l.b16 %v491
    %v563 = vunpack.c.l.b16 %v492
    %v564 = vunpack.c.l.b16 %v493
    %v565 = vunpack.c.l.b16 %v494
    %v566 = vunpack.c.l.b16 %v495
    %v567 = vpack.c.b16 %v536, %v535
    %v568 = vpack.c.b16 %v538, %v537
    %v569 = vpack.c.b16 %v540, %v539
    %v570 = vpack.c.b16 %v542, %v541
    %v571 = vpack.c.b16 %v544, %v543
    %v572 = vpack.c.b16 %v546, %v545
    %v573 = vpack.c.b16 %v548, %v547
    %v574 = vpack.c.b16 %v550, %v549
    %v575 = vpack.c.b16 %v552, %v551
    %v576 = vpack.c.b16 %v554, %v553
    %v577 = vpack.c.b16 %v556, %v555
    %v578 = vpack.c.b16 %v558, %v557
    %v579 = vpack.c.b16 %v560, %v559
    %v580 = vpack.c.b16 %v562, %v561
    %v581 = vpack.c.b16 %v564, %v563
    %v582 = vpack.c.b16 %v566, %v565
    %599 = vmatprep.subr.bf16.mxu0 0
    %600 = vmatpush1.bf16.msra.mxu0 %v574
    %601 = vmatprep.subr.bf16.mxu0 0
    %602 = vmatpush1.bf16.msra.mxu0 %v573
    %603 = vmatprep.subr.bf16.mxu0 0
    %604 = vmatpush1.bf16.msra.mxu0 %v572
    %605 = vmatprep.subr.bf16.mxu0 0
    %606 = vmatpush1.bf16.msra.mxu0 %v571
    %607 = vmatprep.subr.bf16.mxu0 0
    %608 = vmatpush1.bf16.msra.mxu0 %v570
    %609 = vmatprep.subr.bf16.mxu0 0
    %610 = vmatpush1.bf16.msra.mxu0 %v569
    %611 = vmatprep.subr.bf16.mxu0 0
    %612 = vmatpush1.bf16.msra.mxu0 %v568
    %613 = vmatprep.subr.bf16.mxu0 0
    %614 = vmatpush1.bf16.msra.mxu0 %v567
    %615 = vmatprep.subr.bf16.mxu0 0
    %616 = vmatpush2.bf16.msra.mxu0 %v582
    %617 = vmatprep.subr.bf16.mxu0 0
    %618 = vmatpush2.bf16.msra.mxu0 %v581
    %619 = vmatprep.subr.bf16.mxu0 0
    %620 = vmatpush2.bf16.msra.mxu0 %v580
    %621 = vmatprep.subr.bf16.mxu0 0
    %622 = vmatpush2.bf16.msra.mxu0 %v579
    %623 = vmatprep.subr.bf16.mxu0 0
    %624 = vmatpush2.bf16.msra.mxu0 %v578
    %625 = vmatprep.subr.bf16.mxu0 0
    %626 = vmatpush2.bf16.msra.mxu0 %v577
    %627 = vmatprep.subr.bf16.mxu0 0
    %628 = vmatpush2.bf16.msra.mxu0 %v576
    %629 = vmatprep.subr.bf16.mxu0 0
    %630 = vmatpush2.bf16.msra.mxu0 %v575
    %631 = vmatprep.mubr.bf16.mxu0 %v463
    %632 = vmatmul.mubr.bf16.gmra.mxu0 %v462
    %v633 = vpop.f32.mrf.mxu0
    %v634 = vadd.f32 %v501, %v633
    %v635 = vpop.f32.mrf.mxu0
    %v636 = vpop.f32.mrf.mxu0
    %v637 = vadd.f32 %v501, %v636
    %v638 = vpop.f32.mrf.mxu0
    %639 = vdwg.mxu0
    %vm640 = vcmask 64512
    %641 = vst.msk [vmem:[%s9] sm:$0xff] %vm640, %v634
    %642 = vst.msk [vmem:[%s9 + $0x8] sm:$0xff] %vm640, %v637
    %v643 = vmax.f32 %v634, -20.0
    %v644 = vmax.f32 %v637, -20.0
    %v645 = vmin.f32 %v643, 2.0
    %v646 = vmin.f32 %v644, 2.0
    %v647 = vmul.f32 %v645, 1.442695
    %v648 = vpow.pop %v647
    %v649 = vmul.f32 %v646, 1.442695
    %v650 = vpow.pop %v649
    %653 = vrot.lane.b32.xlu0 %v648, 120
    %v654 = vpop.permute.xlu0 %653
    %655 = vrot.lane.b32.xlu0 %v650, 120
    %v656 = vpop.permute.xlu0 %655
    %659 = vst.msk [vmem:[%s10] sm:$0xff] %vm640, %v654
    %660 = vst.msk [vmem:[%s10 + $0x8] sm:$0xff] %vm640, %v656
    // Predicated region
    $region42: #{tpu_custom_call.1} parent=1 // pred_check
      _
    $region43: #{tpu_custom_call.1} parent=1 // pred_check_branch
      %662 = sbr.rel (0) target = $region45
    $region44: #{tpu_custom_call.1} parent=1 // pred_region
      _
    $region45: #{tpu_custom_call.1} parent=1 // pred_fallthru
      _
    // Predicated region
    $region46: #{tpu_custom_call.1} parent=1 // pred_check
      _
    $region47: #{tpu_custom_call.1} parent=1 // pred_check_branch
      %664 = sbr.rel (0) target = $region49
    $region48: #{tpu_custom_call.1} parent=1 // pred_region
      _
    $region49: #{tpu_custom_call.1} parent=1 // pred_fallthru
      _
    // Predicated region
    $region50: #{tpu_custom_call.1} parent=1 // pred_check
      _
    $region51: #{tpu_custom_call.1} parent=1 // pred_check_branch
      %666 = sbr.rel (0) target = $region53
    $region52: #{tpu_custom_call.1} parent=1 // pred_region
      _
    $region53: #{tpu_custom_call.1} parent=1 // pred_fallthru
      _
    // Predicated region
    $region54: #{tpu_custom_call.1} parent=1 // pred_check
      _
    $region55: #{tpu_custom_call.1} parent=1 // pred_check_branch
      %668 = sbr.rel (0) target = $region57
    $region56: #{tpu_custom_call.1} parent=1 // pred_region
      _
    $region57: #{tpu_custom_call.1} parent=1 // pred_fallthru
      _
    %669 = vsyncpa [#allocation3], 1

</llo_original>
